<compile_context>
chip_gen: v7x
topology: tpu7x:2x2x1
jax: 0.10.0
libtpu: 0.0.40
codegen_flags: <defaults>
</compile_context>

<pallas_src>
import numpy as np
import jax
import jax.numpy as jnp
from jax.experimental import pallas as pl
from jax.experimental.pallas import tpu as pltpu


def _band_matrix(L: int, kernel_size: int, stride: int):
    """Averaging matrix A: (L, L_out) with replicate padding folded in.

    out[:, j] = sum_t A[t, j] * x[:, t]  reproduces
    AvgPool1d(kernel_size, stride) over x replicate-padded by (k-1)//2.
    """
    pad = (kernel_size - 1) // 2
    L_pad = L + 2 * pad
    L_out = (L_pad - kernel_size) // stride + 1
    # padded position p = j*stride + m reads source index clip(p - pad, 0, L-1)
    p = np.arange(L_out)[:, None] * stride + np.arange(kernel_size)[None, :]
    t = np.clip(p - pad, 0, L - 1)                       # (L_out, k)
    A = np.zeros((L, L_out), np.float32)
    np.add.at(
        A,
        (t.ravel(), np.repeat(np.arange(L_out), kernel_size)),
        np.float32(1.0 / kernel_size),
    )
    return jnp.asarray(A), L_out


def _pick_row_block(rows: int, L: int, itemsize: int, target_bytes: int = 2 << 20):
    """Row-block size: multiple of 8, divides `rows`, ~1-2 MB per input block."""
    if rows % 8 != 0:
        return rows                                   # single full block (last-2-dim rule)
    cand = (target_bytes // max(1, L * itemsize)) // 8 * 8
    cand = int(max(8, min(rows, cand)))
    if rows >= 16:                                    # keep >=2 grid steps (v7x megacore)
        cand = min(cand, max(8, (rows // 2) // 8 * 8))
    while rows % cand != 0:                           # avoid partial last block
        cand -= 8
    return cand


def _moving_avg_kernel(x_ref, a_ref, o_ref):
    # x_ref: (Rt, L)   lane-dense time axis
    # a_ref: (L, L_out) resident banded averaging matrix
    # o_ref: (Rt, L_out)
    o_ref[...] = jnp.dot(
        x_ref[...].astype(jnp.float32),
        a_ref[...],
        preferred_element_type=jnp.float32,
    ).astype(o_ref.dtype)


def moving_avg(x, kernel_size: int, stride: int = 1):
    """Moving average over the time axis: (B, L, C) -> (B, L_out, C)."""
    B, L, C = x.shape
    A, L_out = _band_matrix(L, kernel_size, stride)

    # Layout plumbing: put the (long) time axis on the lane dimension.
    rows = B * C
    x2 = jnp.transpose(x, (0, 2, 1)).reshape(rows, L)

    Rt = _pick_row_block(rows, L, jnp.dtype(x.dtype).itemsize)
    grid = (rows // Rt,)

    out2 = pl.pallas_call(
        _moving_avg_kernel,
        out_shape=jax.ShapeDtypeStruct((rows, L_out), x.dtype),
        grid=grid,
        in_specs=[
            pl.BlockSpec((Rt, L), lambda i: (i, 0)),
            pl.BlockSpec((L, L_out), lambda i: (0, 0)),   # A resident in VMEM
        ],
        out_specs=pl.BlockSpec((Rt, L_out), lambda i: (i, 0)),
        compiler_params=pltpu.CompilerParams(
            dimension_semantics=("parallel",)),
    )(x2, A)

    return out2.reshape(B, C, L_out).transpose(0, 2, 1)


def moving_avg_ref(x, kernel_size: int, stride: int = 1):
    """Pure-JAX reference matching the PyTorch module."""
    pad = (kernel_size - 1) // 2
    front = jnp.repeat(x[:, 0:1, :], pad, axis=1)
    end = jnp.repeat(x[:, -1:, :], pad, axis=1)
    xp = jnp.concatenate([front, x, end], axis=1)
    L_pad = xp.shape[1]
    L_out = (L_pad - kernel_size) // stride + 1
    wins = jnp.stack(
        [xp[:, k: k + stride * L_out: stride, :] for k in range(kernel_size)],
        axis=0,
    )
    return jnp.mean(wins, axis=0)


if __name__ == "__main__":
    key = jax.random.PRNGKey(0)
    B, L, C = 2, 16, 8
    x = jax.random.normal(key, (B, L, C), dtype=jnp.float32)

    # (kernel_size, stride): default-ish, DLinear default k=25, even-k + stride.
    for kernel_size, stride in [(5, 1), (25, 1), (4, 2)]:
        out = moving_avg(x, kernel_size, stride)
        out = jax.block_until_ready(out)
        ref = moving_avg_ref(x, kernel_size, stride)
        assert out.shape == ref.shape, (kernel_size, stride, out.shape, ref.shape)
        assert jnp.allclose(out, ref, atol=1e-5, rtol=1e-5), (
            f"mismatch vs reference for k={kernel_size}, stride={stride}")

    print("KERNEL_OK")
</pallas_src>

<mosaic_0001>
module attributes {stable_mosaic.version = 11 : i64} {
  func.func @_moving_avg_kernel(%arg0: i32, %arg1: memref<8x16xf32, #tpu.memory_space<vmem>>, %arg2: memref<16x16xf32, #tpu.memory_space<vmem>>, %arg3: memref<8x16xf32, #tpu.memory_space<vmem>>) attributes {dimension_semantics = [#tpu.dimension_semantics<parallel>], iteration_bounds = array<i64: 2>, scalar_prefetch = 0 : i64, scratch_operands = 0 : i64, tpu.core_type = #tpu.core_type<tc>, window_params = [{transform_indices = @transform_0, window_bounds = array<i64: 8, 16>}, {pipeline_mode = #tpu.pipeline_mode<synchronous>, transform_indices = @transform_1, window_bounds = array<i64: 16, 16>}, {transform_indices = @transform_2, window_bounds = array<i64: 8, 16>}]} {
    %c0 = arith.constant 0 : index
    %c0_0 = arith.constant 0 : index
    %0 = vector.load %arg1[%c0, %c0_0] : memref<8x16xf32, #tpu.memory_space<vmem>>, vector<8x16xf32>
    %c0_1 = arith.constant 0 : index
    %c0_2 = arith.constant 0 : index
    %1 = vector.load %arg2[%c0_1, %c0_2] : memref<16x16xf32, #tpu.memory_space<vmem>>, vector<16x16xf32>
    %cst = arith.constant dense<0.000000e+00> : vector<8x16xf32>
    %2 = tpu.matmul %0, %1, %cst {dimension_numbers = #tpu.dot_dimension_numbers<[1], [0], [0], [1], [0, 0, 1, 1], [], []>} : vector<8x16xf32>, vector<16x16xf32>, vector<8x16xf32> -> vector<8x16xf32>
    %c0_3 = arith.constant 0 : index
    %c0_4 = arith.constant 0 : index
    %3 = vector.load %arg3[%c0_3, %c0_4] : memref<8x16xf32, #tpu.memory_space<vmem>>, vector<8x16xf32>
    tpu.vector_store %arg3[%c0_3, %c0_4], %2 {strides = array<i32>} : memref<8x16xf32, #tpu.memory_space<vmem>>, vector<8x16xf32>,
    return
  }
  func.func @transform_0(%arg0: i32) -> (i32, i32) {
    %c0_i32 = arith.constant 0 : i32
    %c0_i32_0 = arith.constant 0 : i32
    return %arg0, %c0_i32 : i32, i32
  }
  func.func @transform_1(%arg0: i32) -> (i32, i32) {
    %c0_i32 = arith.constant 0 : i32
    %c0_i32_0 = arith.constant 0 : i32
    %c0_i32_1 = arith.constant 0 : i32
    return %c0_i32, %c0_i32_0 : i32, i32
  }
  func.func @transform_2(%arg0: i32) -> (i32, i32) {
    %c0_i32 = arith.constant 0 : i32
    %c0_i32_0 = arith.constant 0 : i32
    return %arg0, %c0_i32 : i32, i32
  }
}

</mosaic_0001>

<llo_original>
// kernel: tpu_custom_call.1
$region0: #{tpu_custom_call.1}
  #allocation0 [shape = 'u32[]', space=smem, size = 0x4, offset = 0x4, fixed_abs, tag = 'smem constant byte address 0x4 - core index']
  #allocation1 [shape = 'u32[144,128]{1,0:T(1,128)}', space=vmem, size = 0x12000, scoped, tag = 'internal scratch']
  %s0 = inlined_call_operand.hbm [shape: f32[16,16], index: 0, kind: input, shape index: {}]
  %s1 = inlined_call_operand.hbm [shape: f32[16,16], index: 1, kind: input, shape index: {}]
  %s2 = inlined_call_operand.hbm [shape: f32[16,16], index: 2, kind: output, shape index: {}]
  %s3 = sld [smem:[#allocation0]]
  $region49: #{tpu_custom_call.1} parent=0
    _
  %s5 = ssub.s32 1, %s3
  %s6 = scalar_select 0, %s5, %s3
  $region1: #{tpu_custom_call.1} parent=0
    #allocation2 [shape = 'u8[8192]{0}', space=vmem, size = 0x2000, scoped, tag = 'input window, operand 0']
    #allocation3 [shape = 's32[2]{0}', space=sflag, size = 0x8, scoped, tag = 'scoped memory for tpu_custom_call.1']
    #allocation4 [shape = 's32[2]{0}', space=sflag, size = 0x8, scoped, tag = 'scoped memory for tpu_custom_call.1']
    #allocation5 [shape = 'u8[8192]{0}', space=vmem, size = 0x2000, scoped, tag = 'input window, operand 1, single buffered']
    #allocation6 [shape = 's32[1]{0}', space=sflag, size = 0x4, scoped, tag = 'scoped memory for tpu_custom_call.1']
    #allocation7 [shape = 'u8[8192]{0}', space=vmem, size = 0x2000, scoped, tag = 'output window, operand 0']
    %7 = vsyncpa [#allocation3], 0
    %s8 = scalar_lea.sflag [#allocation3], 1
    %9 = vsyncpa %s8, 0
    %10 = vsyncpa [#allocation6], 0
    %11 = vsyncpa [#allocation4], 0
    %s12 = scalar_lea.sflag [#allocation4], 1
    %13 = vsyncpa %s12, 0
    loop: start=0, step=1, limit=4
    $region2: #{tpu_custom_call.1} parent=1 // loop_pre_header
      _
    $region3: #{tpu_custom_call.1} parent=1 // loop_header
      %s15 = sphi 0, %s19
      %p16 = scmp.ge.s32.totalorder %s15, 4
      %s25 = sphi 0, %s27
      %s28 = sphi 0, %s25
      %s29 = sphi 0, %s28
      %s45 = sphi 0, %s29
      %s49 = sphi 0, %s49
      %s51 = sphi 0, %s49
      %s52 = sphi 0, %s51
      %s66 = sphi 0, %s52
      %s72 = sphi 0, %s74
      %s75 = sphi 0, %s72
      %s76 = sphi 0, %s75
      %s92 = sphi 0, %s76
    $region4: #{tpu_custom_call.1} parent=1 // loop_header_branch
      %18 = sbr.rel (%p16) target = $region8
    $region5: #{tpu_custom_call.1} parent=1 // loop_body
      %s20 = ssub.s32 %s15, 1
      %s21 = ssub.s32 %s15, 2
      %s22 = sadd.s32 %s15, 1
      %s23 = ssub.s32 %s15, %s22
      %p24 = scmp.eq.s32.totalorder %s23, 0
      %s26 = sadd.s32 %s25, 1
      %s27 = scalar_select %p24, %s25, %s26
      %p30 = pneg %p24
      %p31 = scmp.eq.s32.totalorder %s15, 1
      %p32 = por %p30, %p31
      %p33 = scmp.ne.s32.totalorder %s25, %s28
      %p34 = scmp.eq.s32.totalorder %s15, 0
      %p35 = por %p33, %p34
      %p36 = scmp.ne.s32.totalorder %s25, %s28
      %p37 = scmp.eq.s32.totalorder %s20, 1
      %p38 = por %p36, %p37
      %p39 = scmp.ne.s32.totalorder %s28, %s29
      %p40 = scmp.eq.s32.totalorder %s20, 0
      %p41 = por %p39, %p40
      %p42 = scmp.ne.s32.totalorder %s28, %s29
      %p43 = scmp.eq.s32.totalorder %s21, 1
      %p44 = por %p42, %p43
      %p46 = scmp.ne.s32.totalorder %s29, %s45
      %p47 = scmp.eq.s32.totalorder %s21, 0
      %p48 = por %p46, %p47
      %s50 = sadd.s32 %s49, 1
      %p53 = scmp.eq.s32.totalorder %s15, 1
      %p54 = scmp.ne.s32.totalorder %s49, %s51
      %p55 = scmp.eq.s32.totalorder %s15, 0
      %p56 = por %p54, %p55
      %p57 = scmp.ne.s32.totalorder %s49, %s51
      %p58 = scmp.eq.s32.totalorder %s20, 1
      %p59 = por %p57, %p58
      %p60 = scmp.ne.s32.totalorder %s51, %s52
      %p61 = scmp.eq.s32.totalorder %s20, 0
      %p62 = por %p60, %p61
      %p63 = scmp.ne.s32.totalorder %s51, %s52
      %p64 = scmp.eq.s32.totalorder %s21, 1
      %p65 = por %p63, %p64
      %p67 = scmp.ne.s32.totalorder %s52, %s66
      %p68 = scmp.eq.s32.totalorder %s21, 0
      %p69 = por %p67, %p68
      %s70 = ssub.s32 %s15, %s22
      %p71 = scmp.eq.s32.totalorder %s70, 0
      %s73 = sadd.s32 %s72, 1
      %s74 = scalar_select %p71, %s72, %s73
      %p77 = pneg %p71
      %p78 = scmp.eq.s32.totalorder %s15, 1
      %p79 = por %p77, %p78
      %p80 = scmp.ne.s32.totalorder %s72, %s75
      %p81 = scmp.eq.s32.totalorder %s15, 0
      %p82 = por %p80, %p81
      %p83 = scmp.ne.s32.totalorder %s72, %s75
      %p84 = scmp.eq.s32.totalorder %s20, 1
      %p85 = por %p83, %p84
      %p86 = scmp.ne.s32.totalorder %s75, %s76
      %p87 = scmp.eq.s32.totalorder %s20, 0
      %p88 = por %p86, %p87
      %p89 = scmp.ne.s32.totalorder %s75, %s76
      %p90 = scmp.eq.s32.totalorder %s21, 1
      %p91 = por %p89, %p90
      %p93 = scmp.ne.s32.totalorder %s76, %s92
      %p94 = scmp.eq.s32.totalorder %s21, 0
      %p95 = por %p93, %p94
      %p96 = scmp.le.s32.totalorder 1, %s15
      %p97 = scmp.lt.s32.totalorder %s15, 3
      %p98 = pnand %p96, %p97
      %p99 = pneg %p98
      // Predicated region
      $region9: #{tpu_custom_call.1} parent=5 // pred_check
        _
      $region10: #{tpu_custom_call.1} parent=5 // pred_check_branch
        %101 = sbr.rel (%p98) target = $region12
      $region11: #{tpu_custom_call.1} parent=5 // pred_region
        %s102 = ssub.s32 %s15, 1
        // Predicated region
        $region13: #{tpu_custom_call.1} parent=11 // pred_check
          %p103 = pneg %p62
        $region14: #{tpu_custom_call.1} parent=11 // pred_check_branch
          %105 = sbr.rel (%p103) target = $region16
        $region15: #{tpu_custom_call.1} parent=11 // pred_region
          %s107 = ssub.s32 256, 256
          %108 = vsyncadd [#allocation6], %s107
          %s109 = sshll.u32 [#allocation5], 4
          %s110 = int_to_ptr.vmem [resolvable:$true] %s109
          %115 = dma.hbm_to_vmem [thread:$0]  %s1, 256, %s110, [#allocation6], 128, 128, 8
        $region16: #{tpu_custom_call.1} parent=11 // pred_fallthru
          _
      $region12: #{tpu_custom_call.1} parent=5 // pred_fallthru
        _
      %p116 = scmp.lt.s32.totalorder %s15, 2
      // Predicated region
      $region17: #{tpu_custom_call.1} parent=5 // pred_check
        %p117 = pneg %p116
      $region18: #{tpu_custom_call.1} parent=5 // pred_check_branch
        %119 = sbr.rel (%p117) target = $region20
      $region19: #{tpu_custom_call.1} parent=5 // pred_region
        // Predicated region
        $region21: #{tpu_custom_call.1} parent=19 // pred_check
          %p120 = pneg %p35
        $region22: #{tpu_custom_call.1} parent=19 // pred_check_branch
          %122 = sbr.rel (%p120) target = $region24
        $region23: #{tpu_custom_call.1} parent=19 // pred_region
          %s123 = sand.u32 %s25, 1
          %s124 = scalar_lea.sflag [#allocation3], %s123
          %s125 = sand.u32 %s25, 1
          %s126 = smul.addr %s125, 8
          %s127 = scalar_lea.vmem [#allocation2], %s126
          %s129 = ssub.s32 128, 128
          %130 = vsyncadd %s124, %s129
          %s131 = smul.addr %s15, 128
          %s132 = scalar_lea.hbm %s0, %s131
          %s134 = sshll.u32 %s127, 4
          %s135 = int_to_ptr.vmem [resolvable:$true] %s134
          %137 = dma.hbm_to_vmem [thread:$0]  %s132, 128, %s135, %s124
        $region24: #{tpu_custom_call.1} parent=19 // pred_fallthru
          _
      $region20: #{tpu_custom_call.1} parent=5 // pred_fallthru
        _
      %p138 = scmp.le.s32.totalorder 1, %s15
      %p139 = scmp.lt.s32.totalorder %s15, 3
      %p140 = pnand %p138, %p139
      %p141 = pneg %p140
      // Predicated region
      $region25: #{tpu_custom_call.1} parent=5 // pred_check
        _
      $region26: #{tpu_custom_call.1} parent=5 // pred_check_branch
        %143 = sbr.rel (%p140) target = $region28
      $region27: #{tpu_custom_call.1} parent=5 // pred_region
        %s144 = ssub.s32 %s15, 1
        %s145 = sand.u32 %s28, 1
        %s146 = scalar_lea.sflag [#allocation3], %s145
        %s147 = sand.u32 %s28, 1
        %s148 = smul.addr %s147, 8
        %s149 = scalar_lea.vmem [#allocation2], %s148
        // Predicated region
        $region29: #{tpu_custom_call.1} parent=27 // pred_check
          %p150 = pneg %p41
        $region30: #{tpu_custom_call.1} parent=27 // pred_check_branch
          %152 = sbr.rel (%p150) target = $region32
        $region31: #{tpu_custom_call.1} parent=27 // pred_region
          %153 = dma.done %s146, 128
        $region32: #{tpu_custom_call.1} parent=27 // pred_fallthru
          _
        // Predicated region
        $region33: #{tpu_custom_call.1} parent=27 // pred_check
          %p154 = pneg %p62
        $region34: #{tpu_custom_call.1} parent=27 // pred_check_branch
          %156 = sbr.rel (%p154) target = $region36
        $region35: #{tpu_custom_call.1} parent=27 // pred_region
          %157 = dma.done [#allocation6], 256
        $region36: #{tpu_custom_call.1} parent=27 // pred_fallthru
          _
        %s158 = sand.u32 %s28, 1
        %s159 = scalar_lea.sflag [#allocation3], %s158
        %s160 = sand.u32 %s28, 1
        %s161 = smul.addr %s160, 8
        %s162 = scalar_lea.vmem [#allocation2], %s161
        %p163 = pneg %p41
        %p164 = pneg %p38
        %p165 = pneg %p62
        %p166 = pneg %p59
        %p167 = pneg %p88
        %p168 = pneg %p85
        %s169 = sand.u32 %s75, 1
        %s170 = scalar_lea.sflag [#allocation4], %s169
        %s171 = sand.u32 %s75, 1
        %s172 = smul.addr %s171, 8
        %s173 = scalar_lea.vmem [#allocation7], %s172
        %v174 = vld [vmem:[%s149] sm:$0xff]
        %v175 = vld [vmem:[#allocation5] sm:$0xff]
        %v176 = vld [vmem:[#allocation5 + $0x8] sm:$0xff]
        %vm177 = vcmask 130048
        %v179 = vsel %vm177, %v174, 0
        %181 = vmatprep.subr.mxu0 0.0
        %182 = vmatpush1.msra.mxu0 %v175
        %183 = vmatprep.subr.mxu0 0.0
        %184 = vmatpush1.msra.mxu0 %v176
        %185 = vmatprep.subr.mxu0 0.0
        %186 = vmatpush1.msra.mxu0 0.0
        %187 = vmatprep.subr.mxu0 0.0
        %188 = vmatpush1.msra.mxu0 0.0
        %189 = vmatprep.subr.mxu0 0.0
        %190 = vmatpush1.msra.mxu0 0.0
        %191 = vmatprep.subr.mxu0 0.0
        %192 = vmatpush1.msra.mxu0 0.0
        %193 = vmatprep.subr.mxu0 0.0
        %194 = vmatpush1.msra.mxu0 0.0
        %195 = vmatprep.subr.mxu0 0.0
        %196 = vmatpush1.msra.mxu0 0.0
        %197 = vmatprep.subr.mxu0 0.0
        %198 = vmatpush1.msra.mxu0 0.0
        %199 = vmatprep.subr.mxu0 0.0
        %200 = vmatpush1.msra.mxu0 0.0
        %201 = vmatprep.subr.mxu0 0.0
        %202 = vmatpush1.msra.mxu0 0.0
        %203 = vmatprep.subr.mxu0 0.0
        %204 = vmatpush1.msra.mxu0 0.0
        %205 = vmatprep.subr.mxu0 0.0
        %206 = vmatpush1.msra.mxu0 0.0
        %207 = vmatprep.subr.mxu0 0.0
        %208 = vmatpush1.msra.mxu0 0.0
        %209 = vmatprep.subr.mxu0 0.0
        %210 = vmatpush1.msra.mxu0 0.0
        %211 = vmatprep.subr.mxu0 0.0
        %212 = vmatpush1.msra.mxu0 0.0
        %213 = vmatprep.subr.mxu0 0.0
        %214 = vmatpush1.msra.mxu0 0.0
        %215 = vmatprep.subr.mxu0 0.0
        %216 = vmatpush1.msra.mxu0 0.0
        %217 = vmatprep.subr.mxu0 0.0
        %218 = vmatpush1.msra.mxu0 0.0
        %219 = vmatprep.subr.mxu0 0.0
        %220 = vmatpush1.msra.mxu0 0.0
        %221 = vmatprep.subr.mxu0 0.0
        %222 = vmatpush1.msra.mxu0 0.0
        %223 = vmatprep.subr.mxu0 0.0
        %224 = vmatpush1.msra.mxu0 0.0
        %225 = vmatprep.subr.mxu0 0.0
        %226 = vmatpush1.msra.mxu0 0.0
        %227 = vmatprep.subr.mxu0 0.0
        %228 = vmatpush1.msra.mxu0 0.0
        %229 = vmatprep.subr.mxu0 0.0
        %230 = vmatpush1.msra.mxu0 0.0
        %231 = vmatprep.subr.mxu0 0.0
        %232 = vmatpush1.msra.mxu0 0.0
        %233 = vmatprep.subr.mxu0 0.0
        %234 = vmatpush1.msra.mxu0 0.0
        %235 = vmatprep.subr.mxu0 0.0
        %236 = vmatpush1.msra.mxu0 0.0
        %237 = vmatprep.subr.mxu0 0.0
        %238 = vmatpush1.msra.mxu0 0.0
        %239 = vmatprep.subr.mxu0 0.0
        %240 = vmatpush1.msra.mxu0 0.0
        %241 = vmatprep.subr.mxu0 0.0
        %242 = vmatpush1.msra.mxu0 0.0
        %243 = vmatprep.subr.mxu0 0.0
        %244 = vmatpush1.msra.mxu0 0.0
        %245 = vmatprep.mubr.f32.mxu0 0.0
        %246 = vmatmul.mubr.f32.gmra.mrb[0].mxu0 %v179
        %v247 = vpop.f32.mrb[0].mxu0
        %v248 = vadd.f32 0.0, %v247
        %v249 = vpop.f32.mrb[0].mxu0
        %250 = vdwg.mxu0
        %251 = vst.msk [vmem:[%s173] sm:$0xff] %vm177, %v248
        %s252 = sand.u32 %s75, 1
        %s253 = scalar_lea.sflag [#allocation4], %s252
        %s254 = sand.u32 %s75, 1
        %s255 = smul.addr %s254, 8
        %s256 = scalar_lea.vmem [#allocation7], %s255
        // Predicated region
        $region37: #{tpu_custom_call.1} parent=27 // pred_check
          %p257 = pneg %p85
        $region38: #{tpu_custom_call.1} parent=27 // pred_check_branch
          %259 = sbr.rel (%p257) target = $region40
        $region39: #{tpu_custom_call.1} parent=27 // pred_region
          %s261 = ssub.s32 128, 128
          %262 = vsyncadd %s253, %s261
          %s263 = smul.addr %s20, 128
          %s264 = scalar_lea.hbm %s2, %s263
          %s266 = sshll.u32 %s256, 4
          %s267 = int_to_ptr.vmem [resolvable:$true] %s266
          %269 = dma.vmem_to_hbm [thread:$0]  %s267, 128, %s264, %s253
        $region40: #{tpu_custom_call.1} parent=27 // pred_fallthru
          _
      $region28: #{tpu_custom_call.1} parent=5 // pred_fallthru
        _
      %p270 = scmp.le.s32.totalorder 2, %s15
      // Predicated region
      $region41: #{tpu_custom_call.1} parent=5 // pred_check
        %p271 = pneg %p270
      $region42: #{tpu_custom_call.1} parent=5 // pred_check_branch
        %273 = sbr.rel (%p271) target = $region44
      $region43: #{tpu_custom_call.1} parent=5 // pred_region
        %s274 = ssub.s32 %s15, 2
        // Predicated region
        $region45: #{tpu_custom_call.1} parent=43 // pred_check
          %p275 = pneg %p91
        $region46: #{tpu_custom_call.1} parent=43 // pred_check_branch
          %277 = sbr.rel (%p275) target = $region48
        $region47: #{tpu_custom_call.1} parent=43 // pred_region
          %s278 = sand.u32 %s76, 1
          %s279 = scalar_lea.sflag [#allocation4], %s278
          %s280 = sand.u32 %s76, 1
          %s281 = smul.addr %s280, 8
          %s282 = scalar_lea.vmem [#allocation7], %s281
          %283 = dma.done %s279, 128
        $region48: #{tpu_custom_call.1} parent=43 // pred_fallthru
          _
      $region44: #{tpu_custom_call.1} parent=5 // pred_fallthru
        _
    $region6: #{tpu_custom_call.1} parent=1 // loop_footer
      %s19 = sadd.s32 1, %s15
    $region7: #{tpu_custom_call.1} parent=1 // loop_footer_branch
      %14 = sbr.rel target = $region3
    $region8: #{tpu_custom_call.1} parent=1 // loop_exit
      _
    %284 = vsyncpa [#allocation3], 1
    %s285 = scalar_lea.sflag [#allocation3], 1
    %286 = vsyncpa %s285, 1
    %287 = vsyncpa [#allocation6], 1
    %288 = vsyncpa [#allocation4], 1
    %s289 = scalar_lea.sflag [#allocation4], 1
    %290 = vsyncpa %s289, 1

</llo_original>
